<compile_context>
chip_gen: v7x
topology: tpu7x:2x2x1
jax: 0.10.0
libtpu: 0.0.40
codegen_flags: <defaults>
</compile_context>

<pallas_src>
import functools

import jax
import jax.numpy as jnp
from jax.experimental import pallas as pl
from jax.experimental.pallas import tpu as pltpu


# ----------------------------- small helpers -----------------------------

def _round_up(v, m):
    return ((v + m - 1) // m) * m


def _vmem_capacity_bytes():
    """Per-core VMEM capacity; conservative 64 MiB (v7x/TC) if the query fails."""
    try:
        return int(pltpu.get_tpu_info().vmem_capacity_bytes)
    except Exception:
        return 64 << 20


def _pick_tile(total, candidates=(512, 256, 128)):
    """Largest candidate that evenly divides `total`, else the full extent
    (a block equal to the full array dim is always layout-legal)."""
    for c in candidates:
        if total % c == 0:
            return c
    return total


def _pick_bm(B, batch_tile, bm_cap):
    """Batch tile: big enough to amortize the ~0.35us/step grid overhead,
    small enough for VMEM, >= 2 grid steps so both v7x TCs get work."""
    bm = min(batch_tile, bm_cap)
    if bm >= B:
        bm = B                       # block == full batch dim (always legal)
    else:
        bm = max(8, (bm // 8) * 8)   # respect the (8, 128) sublane rule
    if B >= 16 and pl.cdiv(B, bm) < 2:
        bm = max(8, _round_up(pl.cdiv(B, 2), 8))
        if bm >= B:
            bm = B
    return bm


# ----------------------------- kernels -----------------------------

def _mlp_fused_kernel(num_layers_total, x_ref, *refs):
    """Fused MLP: all matmuls + bias adds + ReLUs in one kernel.

    refs = (W0, b0, W1, b1, ..., W_last, b_last, out_ref); weights fully
    resident in VMEM. Matmuls run in the operands' native dtype (bf16 hits the
    bf16-native MXU on v6e/v7x); accumulation, bias add and ReLU in f32
    (biases are passed as f32 rows). Partial last batch tiles are safe: the
    MLP is purely row-wise, so garbage out-of-bounds input rows only produce
    garbage output rows, and those output rows are masked by Pallas.
    """
    out_ref = refs[-1]
    h = x_ref[...]
    for i in range(num_layers_total):
        w = refs[2 * i][...]
        b = refs[2 * i + 1][...]                      # (1, out), already f32
        acc = jnp.dot(h, w, preferred_element_type=jnp.float32) + b
        if i < num_layers_total - 1:
            acc = jnp.maximum(acc, 0.0)
            # Cast back to the matmul dtype before the inter-layer spill:
            # keeps the next MXU pass at native rate and halves vst traffic
            # (v5e has only one vector-store slot).
            h = acc.astype(w.dtype)
        else:
            h = acc
    out_ref[...] = h.astype(out_ref.dtype)


def _linear_kernel(apply_relu, x_ref, w_ref, b_ref, o_ref, acc_ref):
    """One Linear (+ optional ReLU), K-tiled: grid = (M/bm, N/bn, K/bk).
    Reduction axis is last and marked "arbitrary"; f32 VMEM accumulator."""
    k = pl.program_id(2)

    @pl.when(k == 0)
    def _():
        acc_ref[...] = jnp.zeros_like(acc_ref)

    acc_ref[...] += jnp.dot(x_ref[...], w_ref[...],
                            preferred_element_type=jnp.float32)

    @pl.when(k == pl.num_programs(2) - 1)
    def _():
        y = acc_ref[...] + b_ref[...]                 # f32 bias row (1, bn)
        if apply_relu:
            y = jnp.maximum(y, 0.0)
        o_ref[...] = y.astype(o_ref.dtype)


# ----------------------------- parameter prep -----------------------------

def prepare_mlp_params(params, *, compute_dtype=None, lane=128):
    """One-time parameter prep (hoisted out of the per-call forward):
      * final layer out-dim zero-padded to a multiple of 128 lanes so the
        kernel's output store is lane-dense (unmasked vst),
      * biases reshaped to (1, out) rows and kept in float32 regardless of
        compute dtype (KB-scale cost; removes a per-step VPU cast),
      * optional compute_dtype (e.g. bf16) cast of the weights once, for
        native MXU rate on v6e/v7x while accumulation stays f32.
    """
    n_outputs = params[-1][0].shape[1]
    n_out_pad = _round_up(n_outputs, lane)
    weights, biases = [], []
    for li, (W, b) in enumerate(params):
        if li == len(params) - 1 and n_out_pad != n_outputs:
            W = jnp.zeros((W.shape[0], n_out_pad), W.dtype).at[:, :n_outputs].set(W)
            b = jnp.zeros((n_out_pad,), b.dtype).at[:n_outputs].set(b)
        if compute_dtype is not None:
            W = W.astype(compute_dtype)
        weights.append(W)
        biases.append(b.astype(jnp.float32).reshape(1, -1))
    return dict(weights=weights, biases=biases, n_outputs=n_outputs,
                n_out_pad=n_out_pad, compute_dtype=compute_dtype)


# ----------------------------- pallas_call wrappers -----------------------------

def _fused_call(x, weights, biases, bm, n_out_pad, out_dtype, vmem_ceiling,
                param_bytes):
    B, n_in = x.shape
    n_layers = len(weights)
    act_isz = jnp.dtype(x.dtype).itemsize
    out_isz = jnp.dtype(out_dtype).itemsize
    widest = max([n_in] + [W.shape[1] for W in weights])

    tile_bytes = 2 * bm * n_in * act_isz + 2 * bm * n_out_pad * out_isz
    act_bytes = 2 * bm * widest * 4
    vmem_limit = int(min(max(2 * (param_bytes + tile_bytes + act_bytes), 32 << 20),
                         vmem_ceiling))

    flops = 2 * B * sum(W.shape[0] * W.shape[1] for W in weights)
    bytes_accessed = x.size * act_isz + param_bytes + B * n_out_pad * out_isz
    cost = pl.CostEstimate(flops=flops, transcendentals=0,
                           bytes_accessed=bytes_accessed)

    def _const_spec(shape):
        # Constant index_map -> same block every step; single-buffer to halve
        # the resident weight/bias VMEM footprint.
        return pl.BlockSpec(shape, lambda i: (0, 0),
                            pipeline_mode=pl.Buffered(1))

    # TODO(synk): if profiling shows the x-load path binding for very small
    # n_in (e.g. 32) with huge B, pad x's feature dim to 128 lanes here.
    flat_args = []
    in_specs = [pl.BlockSpec((bm, n_in), lambda i: (i, 0))]
    for W, b in zip(weights, biases):
        flat_args += [W, b]
        in_specs += [_const_spec(W.shape), _const_spec(b.shape)]

    return pl.pallas_call(
        functools.partial(_mlp_fused_kernel, n_layers),
        out_shape=jax.ShapeDtypeStruct((B, n_out_pad), out_dtype),
        grid_spec=pltpu.PrefetchScalarGridSpec(
            num_scalar_prefetch=0,
            grid=(pl.cdiv(B, bm),),
            in_specs=in_specs,
            out_specs=pl.BlockSpec((bm, n_out_pad), lambda i: (i, 0)),
        ),
        compiler_params=pltpu.CompilerParams(
            dimension_semantics=("parallel",),
            vmem_limit_bytes=vmem_limit,
        ),
        cost_estimate=cost,
    )(x, *flat_args)


def _linear_streaming(x, W, b, *, apply_relu, bm, out_dtype, vmem_ceiling):
    """One K-/N-tiled Linear (+ReLU) layer with weights streamed over K."""
    B, K = x.shape
    _, N = W.shape
    bk = _pick_tile(K)
    bn = _pick_tile(N)
    act_isz = jnp.dtype(x.dtype).itemsize
    out_isz = jnp.dtype(out_dtype).itemsize

    vmem_need = (2 * bm * bk * act_isz            # x tiles, double-buffered
                 + 2 * bk * bn * W.dtype.itemsize  # weight tiles, double-buffered
                 + 2 * bm * bn * out_isz           # out tiles
                 + bm * bn * 4 + 2 * bn * 4)       # f32 acc + bias
    vmem_limit = int(min(max(2 * vmem_need, 32 << 20), vmem_ceiling))

    cost = pl.CostEstimate(
        flops=2 * B * K * N, transcendentals=0,
        bytes_accessed=(x.size * act_isz + W.size * W.dtype.itemsize
                        + b.size * 4 + B * N * out_isz))

    return pl.pallas_call(
        functools.partial(_linear_kernel, apply_relu),
        out_shape=jax.ShapeDtypeStruct((B, N), out_dtype),
        grid_spec=pltpu.PrefetchScalarGridSpec(
            num_scalar_prefetch=0,
            grid=(pl.cdiv(B, bm), pl.cdiv(N, bn), pl.cdiv(K, bk)),
            in_specs=[
                pl.BlockSpec((bm, bk), lambda i, j, k: (i, k)),
                pl.BlockSpec((bk, bn), lambda i, j, k: (k, j)),
                pl.BlockSpec((1, bn), lambda i, j, k: (0, j)),
            ],
            out_specs=pl.BlockSpec((bm, bn), lambda i, j, k: (i, j)),
            scratch_shapes=[pltpu.VMEM((bm, bn), jnp.float32)],
        ),
        compiler_params=pltpu.CompilerParams(
            dimension_semantics=("parallel", "parallel", "arbitrary"),
            vmem_limit_bytes=vmem_limit,
        ),
        cost_estimate=cost,
    )(x, W, b)


# ----------------------------- forward -----------------------------

def mlp_forward(x, prepped, *, batch_tile=1024, force_streaming=False,
                return_padded=False):
    """x: (B, n_inputs); prepped: output of prepare_mlp_params."""
    weights = prepped["weights"]
    biases = prepped["biases"]
    n_outputs = prepped["n_outputs"]
    n_out_pad = prepped["n_out_pad"]
    compute_dtype = prepped["compute_dtype"]

    out_dtype = x.dtype                       # result keeps the caller's dtype
    if compute_dtype is not None and x.dtype != compute_dtype:
        x = x.astype(compute_dtype)           # bf16 operands -> native MXU rate

    B, n_in = x.shape
    assert n_in == weights[0].shape[0], "feature dim mismatch"
    n_layers = len(weights)
    act_isz = jnp.dtype(x.dtype).itemsize

    vmem_cap = _vmem_capacity_bytes()
    vmem_ceiling = int(0.75 * vmem_cap)       # never request more than 3/4 VMEM

    param_bytes = (sum(W.size * W.dtype.itemsize for W in weights)
                   + sum(b.size * b.dtype.itemsize for b in biases))
    widest = max([n_in] + [W.shape[1] for W in weights])

    # Batch tile sized so (double-buffered x/out tiles + f32 activation slab)
    # plus resident params fit comfortably in ~60% of VMEM.
    per_row = 2 * (n_in + n_out_pad) * act_isz + 2 * widest * 4
    avail = max(int(0.6 * vmem_cap) - param_bytes, 1 << 20)
    bm_cap = max(8, (avail // per_row) // 8 * 8)
    bm = _pick_bm(B, batch_tile, bm_cap)

    # Weight residency budget: 0.375 * VMEM (≈24 MiB on v7x, ≈48 MiB v5e/v6e).
    use_fused = (param_bytes <= int(0.375 * vmem_cap)) and not force_streaming

    if use_fused:
        out = _fused_call(x, weights, biases, bm, n_out_pad, out_dtype,
                          vmem_ceiling, param_bytes)
    else:
        h = x
        for li, (W, b) in enumerate(zip(weights, biases)):
            last = li == n_layers - 1
            h = _linear_streaming(
                h, W, b, apply_relu=not last, bm=bm,
                out_dtype=out_dtype if last else x.dtype,
                vmem_ceiling=vmem_ceiling)
        out = h

    if return_padded or n_out_pad == n_outputs:
        return out
    return out[:, :n_outputs]


# ----------------------------- init / reference -----------------------------

def xavier_uniform(key, fan_in, fan_out, dtype=jnp.float32):
    # matches torch.nn.init.xavier_uniform_ (gain=1); sampled (out,in) like
    # PyTorch then transposed -> (in, out) for the kernel's y = x @ W + b.
    bound = (6.0 / (fan_in + fan_out)) ** 0.5
    w = jax.random.uniform(key, (fan_out, fan_in), dtype, minval=-bound, maxval=bound)
    return w.T


def linear_bias_default(key, fan_in, fan_out, dtype=jnp.float32):
    # PyTorch nn.Linear default bias init: U(-1/sqrt(fan_in), 1/sqrt(fan_in))
    bound = 1.0 / (fan_in ** 0.5)
    return jax.random.uniform(key, (fan_out,), dtype, minval=-bound, maxval=bound)


def init_mlp_params(key, n_inputs, n_outputs, num_layers=2, center_dim=256):
    dims = [n_inputs] + [center_dim] * (num_layers + 1) + [n_outputs]
    params = []
    for li in range(len(dims) - 1):
        key, kw, kb = jax.random.split(key, 3)
        fan_in, fan_out = dims[li], dims[li + 1]
        params.append((xavier_uniform(kw, fan_in, fan_out),
                       linear_bias_default(kb, fan_in, fan_out)))
    return params


def mlp_reference(x, params):
    h = x
    for i, (W, b) in enumerate(params):
        h = h @ W + b
        if i < len(params) - 1:
            h = jnp.maximum(h, 0.0)
    return h


if __name__ == "__main__":
    key = jax.random.PRNGKey(0)
    k_x, k_p = jax.random.split(key)

    # Small shapes consistent with the module's forward.
    batch, n_inputs, n_outputs = 64, 32, 16
    num_layers, center_dim = 2, 256

    x = jax.random.normal(k_x, (batch, n_inputs), dtype=jnp.float32)
    params = init_mlp_params(k_p, n_inputs, n_outputs, num_layers, center_dim)
    ref = mlp_reference(x, params)

    # 1) Fused f32 path (exact match to the reference).
    prep_f32 = prepare_mlp_params(params)
    out = jax.block_until_ready(mlp_forward(x, prep_f32))
    assert out.shape == (batch, n_outputs)
    assert jnp.allclose(out, ref, atol=1e-4, rtol=1e-4), "fused f32 mismatch"

    # 2) K-tiled weight-streaming path (auto-selected when params exceed the
    #    VMEM residency budget) -- forced here to validate it numerically.
    out_s = jax.block_until_ready(mlp_forward(x, prep_f32, force_streaming=True))
    assert out_s.shape == (batch, n_outputs)
    assert jnp.allclose(out_s, ref, atol=1e-4, rtol=1e-4), "streaming mismatch"

    # 3) bf16-operand fast path (native MXU rate on v6e/v7x; f32 accumulation,
    #    f32 biases, f32 output).
    prep_bf16 = prepare_mlp_params(params, compute_dtype=jnp.bfloat16)
    out_bf = jax.block_until_ready(mlp_forward(x, prep_bf16))
    assert out_bf.shape == (batch, n_outputs)
    assert out_bf.dtype == jnp.float32
    assert jnp.allclose(out_bf, ref, atol=1e-1, rtol=1e-1), "bf16 mismatch"

    print("KERNEL_OK")
</pallas_src>

<mosaic_0001>
module attributes {stable_mosaic.version = 11 : i64} {
  func.func @_mlp_fused_kernel(%arg0: i32, %arg1: memref<32x32xf32, #tpu.memory_space<vmem>>, %arg2: memref<32x256xf32, #tpu.memory_space<vmem>>, %arg3: memref<1x256xf32, #tpu.memory_space<vmem>>, %arg4: memref<256x256xf32, #tpu.memory_space<vmem>>, %arg5: memref<1x256xf32, #tpu.memory_space<vmem>>, %arg6: memref<256x256xf32, #tpu.memory_space<vmem>>, %arg7: memref<1x256xf32, #tpu.memory_space<vmem>>, %arg8: memref<256x128xf32, #tpu.memory_space<vmem>>, %arg9: memref<1x128xf32, #tpu.memory_space<vmem>>, %arg10: memref<32x128xf32, #tpu.memory_space<vmem>>) attributes {dimension_semantics = [#tpu.dimension_semantics<parallel>], iteration_bounds = array<i64: 2>, scalar_prefetch = 0 : i64, scratch_operands = 0 : i64, tpu.core_type = #tpu.core_type<tc>, window_params = [{transform_indices = @transform_0, window_bounds = array<i64: 32, 32>}, {pipeline_mode = #tpu.pipeline_mode<synchronous>, transform_indices = @transform_1, window_bounds = array<i64: 32, 256>}, {pipeline_mode = #tpu.pipeline_mode<synchronous>, transform_indices = @transform_2, window_bounds = array<i64: 1, 256>}, {pipeline_mode = #tpu.pipeline_mode<synchronous>, transform_indices = @transform_3, window_bounds = array<i64: 256, 256>}, {pipeline_mode = #tpu.pipeline_mode<synchronous>, transform_indices = @transform_4, window_bounds = array<i64: 1, 256>}, {pipeline_mode = #tpu.pipeline_mode<synchronous>, transform_indices = @transform_5, window_bounds = array<i64: 256, 256>}, {pipeline_mode = #tpu.pipeline_mode<synchronous>, transform_indices = @transform_6, window_bounds = array<i64: 1, 256>}, {pipeline_mode = #tpu.pipeline_mode<synchronous>, transform_indices = @transform_7, window_bounds = array<i64: 256, 128>}, {pipeline_mode = #tpu.pipeline_mode<synchronous>, transform_indices = @transform_8, window_bounds = array<i64: 1, 128>}, {transform_indices = @transform_9, window_bounds = array<i64: 32, 128>}]} {
    %c0 = arith.constant 0 : index
    %c0_0 = arith.constant 0 : index
    %0 = vector.load %arg1[%c0, %c0_0] : memref<32x32xf32, #tpu.memory_space<vmem>>, vector<32x32xf32>
    %c0_1 = arith.constant 0 : index
    %c0_2 = arith.constant 0 : index
    %1 = vector.load %arg2[%c0_1, %c0_2] : memref<32x256xf32, #tpu.memory_space<vmem>>, vector<32x256xf32>
    %c0_3 = arith.constant 0 : index
    %c0_4 = arith.constant 0 : index
    %2 = vector.load %arg3[%c0_3, %c0_4] : memref<1x256xf32, #tpu.memory_space<vmem>>, vector<1x256xf32>
    %cst = arith.constant dense<0.000000e+00> : vector<32x256xf32>
    %3 = tpu.matmul %0, %1, %cst {dimension_numbers = #tpu.dot_dimension_numbers<[1], [0], [0], [1], [0, 0, 1, 1], [], []>} : vector<32x32xf32>, vector<32x256xf32>, vector<32x256xf32> -> vector<32x256xf32>
    %4 = vector.broadcast %2 : vector<1x256xf32> to vector<32x256xf32>
    %5 = arith.addf %3, %4 : vector<32x256xf32>
    %cst_5 = arith.constant 0.000000e+00 : f32
    %6 = vector.broadcast %cst_5 : f32 to vector<32x256xf32>
    %7 = arith.maximumf %5, %6 : vector<32x256xf32>
    %c0_6 = arith.constant 0 : index
    %c0_7 = arith.constant 0 : index
    %8 = vector.load %arg4[%c0_6, %c0_7] : memref<256x256xf32, #tpu.memory_space<vmem>>, vector<256x256xf32>
    %c0_8 = arith.constant 0 : index
    %c0_9 = arith.constant 0 : index
    %9 = vector.load %arg5[%c0_8, %c0_9] : memref<1x256xf32, #tpu.memory_space<vmem>>, vector<1x256xf32>
    %cst_10 = arith.constant dense<0.000000e+00> : vector<32x256xf32>
    %10 = tpu.matmul %7, %8, %cst_10 {dimension_numbers = #tpu.dot_dimension_numbers<[1], [0], [0], [1], [0, 0, 1, 1], [], []>} : vector<32x256xf32>, vector<256x256xf32>, vector<32x256xf32> -> vector<32x256xf32>
    %11 = vector.broadcast %9 : vector<1x256xf32> to vector<32x256xf32>
    %12 = arith.addf %10, %11 : vector<32x256xf32>
    %cst_11 = arith.constant 0.000000e+00 : f32
    %13 = vector.broadcast %cst_11 : f32 to vector<32x256xf32>
    %14 = arith.maximumf %12, %13 : vector<32x256xf32>
    %c0_12 = arith.constant 0 : index
    %c0_13 = arith.constant 0 : index
    %15 = vector.load %arg6[%c0_12, %c0_13] : memref<256x256xf32, #tpu.memory_space<vmem>>, vector<256x256xf32>
    %c0_14 = arith.constant 0 : index
    %c0_15 = arith.constant 0 : index
    %16 = vector.load %arg7[%c0_14, %c0_15] : memref<1x256xf32, #tpu.memory_space<vmem>>, vector<1x256xf32>
    %cst_16 = arith.constant dense<0.000000e+00> : vector<32x256xf32>
    %17 = tpu.matmul %14, %15, %cst_16 {dimension_numbers = #tpu.dot_dimension_numbers<[1], [0], [0], [1], [0, 0, 1, 1], [], []>} : vector<32x256xf32>, vector<256x256xf32>, vector<32x256xf32> -> vector<32x256xf32>
    %18 = vector.broadcast %16 : vector<1x256xf32> to vector<32x256xf32>
    %19 = arith.addf %17, %18 : vector<32x256xf32>
    %cst_17 = arith.constant 0.000000e+00 : f32
    %20 = vector.broadcast %cst_17 : f32 to vector<32x256xf32>
    %21 = arith.maximumf %19, %20 : vector<32x256xf32>
    %c0_18 = arith.constant 0 : index
    %c0_19 = arith.constant 0 : index
    %22 = vector.load %arg8[%c0_18, %c0_19] : memref<256x128xf32, #tpu.memory_space<vmem>>, vector<256x128xf32>
    %c0_20 = arith.constant 0 : index
    %c0_21 = arith.constant 0 : index
    %23 = vector.load %arg9[%c0_20, %c0_21] : memref<1x128xf32, #tpu.memory_space<vmem>>, vector<1x128xf32>
    %cst_22 = arith.constant dense<0.000000e+00> : vector<32x128xf32>
    %24 = tpu.matmul %21, %22, %cst_22 {dimension_numbers = #tpu.dot_dimension_numbers<[1], [0], [0], [1], [0, 0, 1, 1], [], []>} : vector<32x256xf32>, vector<256x128xf32>, vector<32x128xf32> -> vector<32x128xf32>
    %25 = vector.broadcast %23 : vector<1x128xf32> to vector<32x128xf32>
    %26 = arith.addf %24, %25 : vector<32x128xf32>
    %c0_23 = arith.constant 0 : index
    %c0_24 = arith.constant 0 : index
    %27 = vector.load %arg10[%c0_23, %c0_24] : memref<32x128xf32, #tpu.memory_space<vmem>>, vector<32x128xf32>
    tpu.vector_store %arg10[%c0_23, %c0_24], %26 {strides = array<i32>} : memref<32x128xf32, #tpu.memory_space<vmem>>, vector<32x128xf32>,
    return
  }
  func.func @transform_0(%arg0: i32) -> (i32, i32) {
    %c0_i32 = arith.constant 0 : i32
    %c0_i32_0 = arith.constant 0 : i32
    return %arg0, %c0_i32 : i32, i32
  }
  func.func @transform_1(%arg0: i32) -> (i32, i32) {
    %c0_i32 = arith.constant 0 : i32
    %c0_i32_0 = arith.constant 0 : i32
    %c0_i32_1 = arith.constant 0 : i32
    return %c0_i32, %c0_i32_0 : i32, i32
  }
  func.func @transform_2(%arg0: i32) -> (i32, i32) {
    %c0_i32 = arith.constant 0 : i32
    %c0_i32_0 = arith.constant 0 : i32
    %c0_i32_1 = arith.constant 0 : i32
    return %c0_i32, %c0_i32_0 : i32, i32
  }
  func.func @transform_3(%arg0: i32) -> (i32, i32) {
    %c0_i32 = arith.constant 0 : i32
    %c0_i32_0 = arith.constant 0 : i32
    %c0_i32_1 = arith.constant 0 : i32
    return %c0_i32, %c0_i32_0 : i32, i32
  }
  func.func @transform_4(%arg0: i32) -> (i32, i32) {
    %c0_i32 = arith.constant 0 : i32
    %c0_i32_0 = arith.constant 0 : i32
    %c0_i32_1 = arith.constant 0 : i32
    return %c0_i32, %c0_i32_0 : i32, i32
  }
  func.func @transform_5(%arg0: i32) -> (i32, i32) {
    %c0_i32 = arith.constant 0 : i32
    %c0_i32_0 = arith.constant 0 : i32
    %c0_i32_1 = arith.constant 0 : i32
    return %c0_i32, %c0_i32_0 : i32, i32
  }
  func.func @transform_6(%arg0: i32) -> (i32, i32) {
    %c0_i32 = arith.constant 0 : i32
    %c0_i32_0 = arith.constant 0 : i32
    %c0_i32_1 = arith.constant 0 : i32
    return %c0_i32, %c0_i32_0 : i32, i32
  }
  func.func @transform_7(%arg0: i32) -> (i32, i32) {
    %c0_i32 = arith.constant 0 : i32
    %c0_i32_0 = arith.constant 0 : i32
    %c0_i32_1 = arith.constant 0 : i32
    return %c0_i32, %c0_i32_0 : i32, i32
  }
  func.func @transform_8(%arg0: i32) -> (i32, i32) {
    %c0_i32 = arith.constant 0 : i32
    %c0_i32_0 = arith.constant 0 : i32
    %c0_i32_1 = arith.constant 0 : i32
    return %c0_i32, %c0_i32_0 : i32, i32
  }
  func.func @transform_9(%arg0: i32) -> (i32, i32) {
    %c0_i32 = arith.constant 0 : i32
    %c0_i32_0 = arith.constant 0 : i32
    return %arg0, %c0_i32 : i32, i32
  }
}

</mosaic_0001>

<llo_original>
// kernel: tpu_custom_call.1
$region0: #{tpu_custom_call.1}
  #allocation0 [shape = 'u32[]', space=smem, size = 0x4, offset = 0x4, fixed_abs, tag = 'smem constant byte address 0x4 - core index']
  #allocation1 [shape = 'u32[144,128]{1,0:T(1,128)}', space=vmem, size = 0x12000, scoped, tag = 'internal scratch']
  %s0 = inlined_call_operand.vmem [shape: f32[64,32], index: 0, kind: input, shape index: {}]
  %s1 = inlined_call_operand.vmem [shape: f32[32,256], index: 1, kind: input, shape index: {}]
  %s2 = inlined_call_operand.vmem [shape: f32[1,256], index: 2, kind: input, shape index: {}]
  %s3 = inlined_call_operand.hbm [shape: f32[256,256], index: 3, kind: input, shape index: {}]
  %s4 = inlined_call_operand.vmem [shape: f32[1,256], index: 4, kind: input, shape index: {}]
  %s5 = inlined_call_operand.hbm [shape: f32[256,256], index: 5, kind: input, shape index: {}]
  %s6 = inlined_call_operand.vmem [shape: f32[1,256], index: 6, kind: input, shape index: {}]
  %s7 = inlined_call_operand.hbm [shape: f32[256,128], index: 7, kind: input, shape index: {}]
  %s8 = inlined_call_operand.vmem [shape: f32[1,128], index: 8, kind: input, shape index: {}]
  %s9 = inlined_call_operand.hbm [shape: f32[64,128], index: 9, kind: output, shape index: {}]
  %s10 = sld [smem:[#allocation0]]
  $region81: #{tpu_custom_call.1} parent=0
    _
  %s12 = ssub.s32 1, %s10
  %s13 = scalar_select 0, %s12, %s10
  $region1: #{tpu_custom_call.1} parent=0
    #allocation2 [shape = 'u8[262144]{0}', space=vmem, size = 0x40000, scoped, tag = 'input window, operand 3, single buffered']
    #allocation3 [shape = 's32[2]{0}', space=sflag, size = 0x8, scoped, tag = 'scoped memory for tpu_custom_call.1']
    #allocation4 [shape = 's32[2]{0}', space=sflag, size = 0x8, scoped, tag = 'scoped memory for tpu_custom_call.1']
    #allocation5 [shape = 'u8[262144]{0}', space=vmem, size = 0x40000, scoped, tag = 'input window, operand 5, single buffered']
    #allocation6 [shape = 's32[1]{0}', space=sflag, size = 0x4, scoped, tag = 'scoped memory for tpu_custom_call.1']
    #allocation7 [shape = 'u8[131072]{0}', space=vmem, size = 0x20000, scoped, tag = 'input window, operand 7, single buffered']
    #allocation8 [shape = 'u8[32768]{0}', space=vmem, size = 0x8000, scoped, tag = 'output window, operand 0']
    %14 = vsyncpa [#allocation3], 0
    %15 = vsyncpa [#allocation6], 0
    %16 = vsyncpa [#allocation4], 0
    %s17 = scalar_lea.sflag [#allocation4], 1
    %18 = vsyncpa %s17, 0
    loop: start=0, step=1, limit=4
    $region2: #{tpu_custom_call.1} parent=1 // loop_pre_header
      _
    $region3: #{tpu_custom_call.1} parent=1 // loop_header
      %s20 = sphi 0, %s24
      %p21 = scmp.ge.s32.totalorder %s20, 4
      %s30 = sphi 0, %s32
      %s33 = sphi 0, %s30
      %s34 = sphi 0, %s33
      %s50 = sphi 0, %s34
      %s54 = sphi 0, %s54
      %s56 = sphi 0, %s54
      %s57 = sphi 0, %s56
      %s71 = sphi 0, %s57
      %s75 = sphi 0, %s75
      %s77 = sphi 0, %s75
      %s78 = sphi 0, %s77
      %s92 = sphi 0, %s78
      %s96 = sphi 0, %s96
      %s98 = sphi 0, %s96
      %s99 = sphi 0, %s98
      %s113 = sphi 0, %s99
      %s117 = sphi 0, %s117
      %s119 = sphi 0, %s117
      %s120 = sphi 0, %s119
      %s134 = sphi 0, %s120
      %s138 = sphi 0, %s138
      %s140 = sphi 0, %s138
      %s141 = sphi 0, %s140
      %s155 = sphi 0, %s141
      %s159 = sphi 0, %s159
      %s161 = sphi 0, %s159
      %s162 = sphi 0, %s161
      %s176 = sphi 0, %s162
      %s180 = sphi 0, %s180
      %s182 = sphi 0, %s180
      %s183 = sphi 0, %s182
      %s197 = sphi 0, %s183
      %s201 = sphi 0, %s201
      %s203 = sphi 0, %s201
      %s204 = sphi 0, %s203
      %s218 = sphi 0, %s204
      %s224 = sphi 0, %s226
      %s227 = sphi 0, %s224
      %s228 = sphi 0, %s227
      %s244 = sphi 0, %s228
    $region4: #{tpu_custom_call.1} parent=1 // loop_header_branch
      %23 = sbr.rel (%p21) target = $region8
    $region5: #{tpu_custom_call.1} parent=1 // loop_body
      %s25 = ssub.s32 %s20, 1
      %s26 = ssub.s32 %s20, 2
      %s27 = sadd.s32 %s20, 1
      %s28 = ssub.s32 %s20, %s27
      %p29 = scmp.eq.s32.totalorder %s28, 0
      %s31 = sadd.s32 %s30, 1
      %s32 = scalar_select %p29, %s30, %s31
      %p35 = pneg %p29
      %p36 = scmp.eq.s32.totalorder %s20, 1
      %p37 = por %p35, %p36
      %p38 = scmp.ne.s32.totalorder %s30, %s33
      %p39 = scmp.eq.s32.totalorder %s20, 0
      %p40 = por %p38, %p39
      %p41 = scmp.ne.s32.totalorder %s30, %s33
      %p42 = scmp.eq.s32.totalorder %s25, 1
      %p43 = por %p41, %p42
      %p44 = scmp.ne.s32.totalorder %s33, %s34
      %p45 = scmp.eq.s32.totalorder %s25, 0
      %p46 = por %p44, %p45
      %p47 = scmp.ne.s32.totalorder %s33, %s34
      %p48 = scmp.eq.s32.totalorder %s26, 1
      %p49 = por %p47, %p48
      %p51 = scmp.ne.s32.totalorder %s34, %s50
      %p52 = scmp.eq.s32.totalorder %s26, 0
      %p53 = por %p51, %p52
      %s55 = sadd.s32 %s54, 1
      %p58 = scmp.eq.s32.totalorder %s20, 1
      %p59 = scmp.ne.s32.totalorder %s54, %s56
      %p60 = scmp.eq.s32.totalorder %s20, 0
      %p61 = por %p59, %p60
      %p62 = scmp.ne.s32.totalorder %s54, %s56
      %p63 = scmp.eq.s32.totalorder %s25, 1
      %p64 = por %p62, %p63
      %p65 = scmp.ne.s32.totalorder %s56, %s57
      %p66 = scmp.eq.s32.totalorder %s25, 0
      %p67 = por %p65, %p66
      %p68 = scmp.ne.s32.totalorder %s56, %s57
      %p69 = scmp.eq.s32.totalorder %s26, 1
      %p70 = por %p68, %p69
      %p72 = scmp.ne.s32.totalorder %s57, %s71
      %p73 = scmp.eq.s32.totalorder %s26, 0
      %p74 = por %p72, %p73
      %s76 = sadd.s32 %s75, 1
      %p79 = scmp.eq.s32.totalorder %s20, 1
      %p80 = scmp.ne.s32.totalorder %s75, %s77
      %p81 = scmp.eq.s32.totalorder %s20, 0
      %p82 = por %p80, %p81
      %p83 = scmp.ne.s32.totalorder %s75, %s77
      %p84 = scmp.eq.s32.totalorder %s25, 1
      %p85 = por %p83, %p84
      %p86 = scmp.ne.s32.totalorder %s77, %s78
      %p87 = scmp.eq.s32.totalorder %s25, 0
      %p88 = por %p86, %p87
      %p89 = scmp.ne.s32.totalorder %s77, %s78
      %p90 = scmp.eq.s32.totalorder %s26, 1
      %p91 = por %p89, %p90
      %p93 = scmp.ne.s32.totalorder %s78, %s92
      %p94 = scmp.eq.s32.totalorder %s26, 0
      %p95 = por %p93, %p94
      %s97 = sadd.s32 %s96, 1
      %p100 = scmp.eq.s32.totalorder %s20, 1
      %p101 = scmp.ne.s32.totalorder %s96, %s98
      %p102 = scmp.eq.s32.totalorder %s20, 0
      %p103 = por %p101, %p102
      %p104 = scmp.ne.s32.totalorder %s96, %s98
      %p105 = scmp.eq.s32.totalorder %s25, 1
      %p106 = por %p104, %p105
      %p107 = scmp.ne.s32.totalorder %s98, %s99
      %p108 = scmp.eq.s32.totalorder %s25, 0
      %p109 = por %p107, %p108
      %p110 = scmp.ne.s32.totalorder %s98, %s99
      %p111 = scmp.eq.s32.totalorder %s26, 1
      %p112 = por %p110, %p111
      %p114 = scmp.ne.s32.totalorder %s99, %s113
      %p115 = scmp.eq.s32.totalorder %s26, 0
      %p116 = por %p114, %p115
      %s118 = sadd.s32 %s117, 1
      %p121 = scmp.eq.s32.totalorder %s20, 1
      %p122 = scmp.ne.s32.totalorder %s117, %s119
      %p123 = scmp.eq.s32.totalorder %s20, 0
      %p124 = por %p122, %p123
      %p125 = scmp.ne.s32.totalorder %s117, %s119
      %p126 = scmp.eq.s32.totalorder %s25, 1
      %p127 = por %p125, %p126
      %p128 = scmp.ne.s32.totalorder %s119, %s120
      %p129 = scmp.eq.s32.totalorder %s25, 0
      %p130 = por %p128, %p129
      %p131 = scmp.ne.s32.totalorder %s119, %s120
      %p132 = scmp.eq.s32.totalorder %s26, 1
      %p133 = por %p131, %p132
      %p135 = scmp.ne.s32.totalorder %s120, %s134
      %p136 = scmp.eq.s32.totalorder %s26, 0
      %p137 = por %p135, %p136
      %s139 = sadd.s32 %s138, 1
      %p142 = scmp.eq.s32.totalorder %s20, 1
      %p143 = scmp.ne.s32.totalorder %s138, %s140
      %p144 = scmp.eq.s32.totalorder %s20, 0
      %p145 = por %p143, %p144
      %p146 = scmp.ne.s32.totalorder %s138, %s140
      %p147 = scmp.eq.s32.totalorder %s25, 1
      %p148 = por %p146, %p147
      %p149 = scmp.ne.s32.totalorder %s140, %s141
      %p150 = scmp.eq.s32.totalorder %s25, 0
      %p151 = por %p149, %p150
      %p152 = scmp.ne.s32.totalorder %s140, %s141
      %p153 = scmp.eq.s32.totalorder %s26, 1
      %p154 = por %p152, %p153
      %p156 = scmp.ne.s32.totalorder %s141, %s155
      %p157 = scmp.eq.s32.totalorder %s26, 0
      %p158 = por %p156, %p157
      %s160 = sadd.s32 %s159, 1
      %p163 = scmp.eq.s32.totalorder %s20, 1
      %p164 = scmp.ne.s32.totalorder %s159, %s161
      %p165 = scmp.eq.s32.totalorder %s20, 0
      %p166 = por %p164, %p165
      %p167 = scmp.ne.s32.totalorder %s159, %s161
      %p168 = scmp.eq.s32.totalorder %s25, 1
      %p169 = por %p167, %p168
      %p170 = scmp.ne.s32.totalorder %s161, %s162
      %p171 = scmp.eq.s32.totalorder %s25, 0
      %p172 = por %p170, %p171
      %p173 = scmp.ne.s32.totalorder %s161, %s162
      %p174 = scmp.eq.s32.totalorder %s26, 1
      %p175 = por %p173, %p174
      %p177 = scmp.ne.s32.totalorder %s162, %s176
      %p178 = scmp.eq.s32.totalorder %s26, 0
      %p179 = por %p177, %p178
      %s181 = sadd.s32 %s180, 1
      %p184 = scmp.eq.s32.totalorder %s20, 1
      %p185 = scmp.ne.s32.totalorder %s180, %s182
      %p186 = scmp.eq.s32.totalorder %s20, 0
      %p187 = por %p185, %p186
      %p188 = scmp.ne.s32.totalorder %s180, %s182
      %p189 = scmp.eq.s32.totalorder %s25, 1
      %p190 = por %p188, %p189
      %p191 = scmp.ne.s32.totalorder %s182, %s183
      %p192 = scmp.eq.s32.totalorder %s25, 0
      %p193 = por %p191, %p192
      %p194 = scmp.ne.s32.totalorder %s182, %s183
      %p195 = scmp.eq.s32.totalorder %s26, 1
      %p196 = por %p194, %p195
      %p198 = scmp.ne.s32.totalorder %s183, %s197
      %p199 = scmp.eq.s32.totalorder %s26, 0
      %p200 = por %p198, %p199
      %s202 = sadd.s32 %s201, 1
      %p205 = scmp.eq.s32.totalorder %s20, 1
      %p206 = scmp.ne.s32.totalorder %s201, %s203
      %p207 = scmp.eq.s32.totalorder %s20, 0
      %p208 = por %p206, %p207
      %p209 = scmp.ne.s32.totalorder %s201, %s203
      %p210 = scmp.eq.s32.totalorder %s25, 1
      %p211 = por %p209, %p210
      %p212 = scmp.ne.s32.totalorder %s203, %s204
      %p213 = scmp.eq.s32.totalorder %s25, 0
      %p214 = por %p212, %p213
      %p215 = scmp.ne.s32.totalorder %s203, %s204
      %p216 = scmp.eq.s32.totalorder %s26, 1
      %p217 = por %p215, %p216
      %p219 = scmp.ne.s32.totalorder %s204, %s218
      %p220 = scmp.eq.s32.totalorder %s26, 0
      %p221 = por %p219, %p220
      %s222 = ssub.s32 %s20, %s27
      %p223 = scmp.eq.s32.totalorder %s222, 0
      %s225 = sadd.s32 %s224, 1
      %s226 = scalar_select %p223, %s224, %s225
      %p229 = pneg %p223
      %p230 = scmp.eq.s32.totalorder %s20, 1
      %p231 = por %p229, %p230
      %p232 = scmp.ne.s32.totalorder %s224, %s227
      %p233 = scmp.eq.s32.totalorder %s20, 0
      %p234 = por %p232, %p233
      %p235 = scmp.ne.s32.totalorder %s224, %s227
      %p236 = scmp.eq.s32.totalorder %s25, 1
      %p237 = por %p235, %p236
      %p238 = scmp.ne.s32.totalorder %s227, %s228
      %p239 = scmp.eq.s32.totalorder %s25, 0
      %p240 = por %p238, %p239
      %p241 = scmp.ne.s32.totalorder %s227, %s228
      %p242 = scmp.eq.s32.totalorder %s26, 1
      %p243 = por %p241, %p242
      %p245 = scmp.ne.s32.totalorder %s228, %s244
      %p246 = scmp.eq.s32.totalorder %s26, 0
      %p247 = por %p245, %p246
      %p248 = scmp.le.s32.totalorder 1, %s20
      %p249 = scmp.lt.s32.totalorder %s20, 3
      %p250 = pnand %p248, %p249
      %p251 = pneg %p250
      // Predicated region
      $region9: #{tpu_custom_call.1} parent=5 // pred_check
        _
      $region10: #{tpu_custom_call.1} parent=5 // pred_check_branch
        %253 = sbr.rel (%p250) target = $region12
      $region11: #{tpu_custom_call.1} parent=5 // pred_region
        %s254 = ssub.s32 %s20, 1
        // Predicated region
        $region13: #{tpu_custom_call.1} parent=11 // pred_check
          %p255 = pneg %p67
        $region14: #{tpu_custom_call.1} parent=11 // pred_check_branch
          %257 = sbr.rel (%p255) target = $region16
        $region15: #{tpu_custom_call.1} parent=11 // pred_region
          _
        $region16: #{tpu_custom_call.1} parent=11 // pred_fallthru
          _
        // Predicated region
        $region17: #{tpu_custom_call.1} parent=11 // pred_check
          %p258 = pneg %p88
        $region18: #{tpu_custom_call.1} parent=11 // pred_check_branch
          %260 = sbr.rel (%p258) target = $region20
        $region19: #{tpu_custom_call.1} parent=11 // pred_region
          _
        $region20: #{tpu_custom_call.1} parent=11 // pred_fallthru
          _
        // Predicated region
        $region21: #{tpu_custom_call.1} parent=11 // pred_check
          %p261 = pneg %p109
        $region22: #{tpu_custom_call.1} parent=11 // pred_check_branch
          %263 = sbr.rel (%p261) target = $region24
        $region23: #{tpu_custom_call.1} parent=11 // pred_region
          %s265 = ssub.s32 8192, 8192
          %266 = vsyncadd [#allocation3], %s265
          %s267 = sshll.u32 [#allocation2], 4
          %s268 = int_to_ptr.vmem [resolvable:$true] %s267
          %273 = dma.hbm_to_vmem [thread:$0]  %s3, 8192, %s268, [#allocation3], 256, 256, 16
        $region24: #{tpu_custom_call.1} parent=11 // pred_fallthru
          _
        // Predicated region
        $region25: #{tpu_custom_call.1} parent=11 // pred_check
          %p274 = pneg %p130
        $region26: #{tpu_custom_call.1} parent=11 // pred_check_branch
          %276 = sbr.rel (%p274) target = $region28
        $region27: #{tpu_custom_call.1} parent=11 // pred_region
          _
        $region28: #{tpu_custom_call.1} parent=11 // pred_fallthru
          _
        // Predicated region
        $region29: #{tpu_custom_call.1} parent=11 // pred_check
          %p277 = pneg %p151
        $region30: #{tpu_custom_call.1} parent=11 // pred_check_branch
          %279 = sbr.rel (%p277) target = $region32
        $region31: #{tpu_custom_call.1} parent=11 // pred_region
          %s281 = ssub.s32 8192, 8192
          %282 = vsyncadd [#allocation6], %s281
          %s283 = sshll.u32 [#allocation5], 4
          %s284 = int_to_ptr.vmem [resolvable:$true] %s283
          %289 = dma.hbm_to_vmem [thread:$0]  %s5, 8192, %s284, [#allocation6], 256, 256, 16
        $region32: #{tpu_custom_call.1} parent=11 // pred_fallthru
          _
        // Predicated region
        $region33: #{tpu_custom_call.1} parent=11 // pred_check
          %p290 = pneg %p172
        $region34: #{tpu_custom_call.1} parent=11 // pred_check_branch
          %292 = sbr.rel (%p290) target = $region36
        $region35: #{tpu_custom_call.1} parent=11 // pred_region
          _
        $region36: #{tpu_custom_call.1} parent=11 // pred_fallthru
          _
        // Predicated region
        $region37: #{tpu_custom_call.1} parent=11 // pred_check
          %p293 = pneg %p193
        $region38: #{tpu_custom_call.1} parent=11 // pred_check_branch
          %295 = sbr.rel (%p293) target = $region40
        $region39: #{tpu_custom_call.1} parent=11 // pred_region
          %s297 = ssub.s32 4096, 4096
          %298 = vsyncadd [#allocation6], %s297
          %s299 = sshll.u32 [#allocation7], 4
          %s300 = int_to_ptr.vmem [resolvable:$true] %s299
          %305 = dma.hbm_to_vmem [thread:$0]  %s7, 4096, %s300, [#allocation6], 128, 128, 8
        $region40: #{tpu_custom_call.1} parent=11 // pred_fallthru
          _
        // Predicated region
        $region41: #{tpu_custom_call.1} parent=11 // pred_check
          %p306 = pneg %p214
        $region42: #{tpu_custom_call.1} parent=11 // pred_check_branch
          %308 = sbr.rel (%p306) target = $region44
        $region43: #{tpu_custom_call.1} parent=11 // pred_region
          _
        $region44: #{tpu_custom_call.1} parent=11 // pred_fallthru
          _
      $region12: #{tpu_custom_call.1} parent=5 // pred_fallthru
        _
      %p309 = scmp.lt.s32.totalorder %s20, 2
      // Predicated region
      $region45: #{tpu_custom_call.1} parent=5 // pred_check
        %p310 = pneg %p309
      $region46: #{tpu_custom_call.1} parent=5 // pred_check_branch
        %312 = sbr.rel (%p310) target = $region48
      $region47: #{tpu_custom_call.1} parent=5 // pred_region
        // Predicated region
        $region49: #{tpu_custom_call.1} parent=47 // pred_check
          %p313 = pneg %p40
        $region50: #{tpu_custom_call.1} parent=47 // pred_check_branch
          %315 = sbr.rel (%p313) target = $region52
        $region51: #{tpu_custom_call.1} parent=47 // pred_region
          %s316 = smul.u32 4, %s20
          %p317 = scmp.lt.s32.totalorder %s316, 7
          %s318 = scalar_select %p317, %s316, 7
          %s319 = smul.addr %s318, 8
          %s320 = scalar_lea.vmem %s0, %s319
          %s321 = smul.u32 4, %s20
        $region52: #{tpu_custom_call.1} parent=47 // pred_fallthru
          _
      $region48: #{tpu_custom_call.1} parent=5 // pred_fallthru
        _
      %p322 = scmp.le.s32.totalorder 1, %s20
      %p323 = scmp.lt.s32.totalorder %s20, 3
      %p324 = pnand %p322, %p323
      %p325 = pneg %p324
      // Predicated region
      $region53: #{tpu_custom_call.1} parent=5 // pred_check
        _
      $region54: #{tpu_custom_call.1} parent=5 // pred_check_branch
        %327 = sbr.rel (%p324) target = $region56
      $region55: #{tpu_custom_call.1} parent=5 // pred_region
        %s328 = ssub.s32 %s20, 1
        // Predicated region
        $region57: #{tpu_custom_call.1} parent=55 // pred_check
          %p329 = pneg %p109
        $region58: #{tpu_custom_call.1} parent=55 // pred_check_branch
          %331 = sbr.rel (%p329) target = $region60
        $region59: #{tpu_custom_call.1} parent=55 // pred_region
          %332 = dma.done [#allocation3], 8192
        $region60: #{tpu_custom_call.1} parent=55 // pred_fallthru
          _
        // Predicated region
        $region61: #{tpu_custom_call.1} parent=55 // pred_check
          %p333 = pneg %p151
        $region62: #{tpu_custom_call.1} parent=55 // pred_check_branch
          %335 = sbr.rel (%p333) target = $region64
        $region63: #{tpu_custom_call.1} parent=55 // pred_region
          %336 = dma.done [#allocation6], 8192
        $region64: #{tpu_custom_call.1} parent=55 // pred_fallthru
          _
        // Predicated region
        $region65: #{tpu_custom_call.1} parent=55 // pred_check
          %p337 = pneg %p193
        $region66: #{tpu_custom_call.1} parent=55 // pred_check_branch
          %339 = sbr.rel (%p337) target = $region68
        $region67: #{tpu_custom_call.1} parent=55 // pred_region
          %340 = dma.done [#allocation6], 4096
        $region68: #{tpu_custom_call.1} parent=55 // pred_fallthru
          _
        %s341 = smul.u32 4, %s25
        %p342 = scmp.lt.s32.totalorder %s341, 7
        %s343 = scalar_select %p342, %s341, 7
        %s344 = smul.addr %s343, 8
        %s345 = scalar_lea.vmem %s0, %s344
        %p346 = pneg %p46
        %p347 = pneg %p43
        %p348 = pneg %p67
        %p349 = pneg %p64
        %p350 = pneg %p88
        %p351 = pneg %p85
        %p352 = pneg %p109
        %p353 = pneg %p106
        %p354 = pneg %p130
        %p355 = pneg %p127
        %p356 = pneg %p151
        %p357 = pneg %p148
        %p358 = pneg %p172
        %p359 = pneg %p169
        %p360 = pneg %p193
        %p361 = pneg %p190
        %p362 = pneg %p214
        %p363 = pneg %p211
        %p364 = pneg %p240
        %p365 = pneg %p237
        %s366 = sand.u32 %s227, 1
        %s367 = scalar_lea.sflag [#allocation4], %s366
        %s368 = sand.u32 %s227, 1
        %s369 = smul.addr %s368, 32
        %s370 = scalar_lea.vmem [#allocation8], %s369
        %s371 = smul.u32 4, %s25
        %p372 = scmp.lt.s32.totalorder %s371, 7
        %s373 = scalar_select %p372, %s371, 7
        %s374 = smul.addr %s373, 8
        %s375 = scalar_lea.vmem %s0, %s374
        %s376 = smul.u32 4, %s25
        %s377 = smul.u32 4, %s25
        %v378 = vld [vmem:[%s375] sm:$0xff]
        %v379 = vld [vmem:[%s375 + $0x8] sm:$0xff]
        %v380 = vld [vmem:[%s375 + $0x10] sm:$0xff]
        %v381 = vld [vmem:[%s375 + $0x18] sm:$0xff]
        %v382 = vld [vmem:[%s1] sm:$0xff]
        %v383 = vld [vmem:[%s1 + $0x8] sm:$0xff]
        %v384 = vld [vmem:[%s1 + $0x10] sm:$0xff]
        %v385 = vld [vmem:[%s1 + $0x18] sm:$0xff]
        %v386 = vld [vmem:[%s1 + $0x20] sm:$0xff]
        %v387 = vld [vmem:[%s1 + $0x28] sm:$0xff]
        %v388 = vld [vmem:[%s1 + $0x30] sm:$0xff]
        %v389 = vld [vmem:[%s1 + $0x38] sm:$0xff]
        %v390 = vld [vmem:[%s2] sm:$0x3]
        %v392 = vlaneseq
        %v393 = vshrl.u32 %v392, 7
        %v394 = vsub.s32 0, %v393
        %v395 = vrot.slane %v390, %v394
        %v396 = vlaneseq
        %v397 = vshrl.u32 %v396, 7
        %v398 = vsub.s32 1, %v397
        %v399 = vrot.slane %v390, %v398
        %vm402 = vcmask 261120
        %v404 = vsel %vm402, %v378, 0
        %v407 = vsel %vm402, %v379, 0
        %v410 = vsel %vm402, %v380, 0
        %v413 = vsel %vm402, %v381, 0
        %415 = vmatprep.subr.mxu0 %v383
        %416 = vmatpush1.msra.mxu0 %v382
        %417 = vmatprep.subr.mxu0 %v385
        %418 = vmatpush1.msra.mxu0 %v384
        %419 = vmatprep.subr.mxu0 %v387
        %420 = vmatpush1.msra.mxu0 %v386
        %421 = vmatprep.subr.mxu0 %v389
        %422 = vmatpush1.msra.mxu0 %v388
        %423 = vmatprep.subr.mxu0 0.0
        %424 = vmatpush1.msra.mxu0 0.0
        %425 = vmatprep.subr.mxu0 0.0
        %426 = vmatpush1.msra.mxu0 0.0
        %427 = vmatprep.subr.mxu0 0.0
        %428 = vmatpush1.msra.mxu0 0.0
        %429 = vmatprep.subr.mxu0 0.0
        %430 = vmatpush1.msra.mxu0 0.0
        %431 = vmatprep.subr.mxu0 0.0
        %432 = vmatpush1.msra.mxu0 0.0
        %433 = vmatprep.subr.mxu0 0.0
        %434 = vmatpush1.msra.mxu0 0.0
        %435 = vmatprep.subr.mxu0 0.0
        %436 = vmatpush1.msra.mxu0 0.0
        %437 = vmatprep.subr.mxu0 0.0
        %438 = vmatpush1.msra.mxu0 0.0
        %439 = vmatprep.subr.mxu0 0.0
        %440 = vmatpush1.msra.mxu0 0.0
        %441 = vmatprep.subr.mxu0 0.0
        %442 = vmatpush1.msra.mxu0 0.0
        %443 = vmatprep.subr.mxu0 0.0
        %444 = vmatpush1.msra.mxu0 0.0
        %445 = vmatprep.subr.mxu0 0.0
        %446 = vmatpush1.msra.mxu0 0.0
        %447 = vmatprep.subr.mxu0 0.0
        %448 = vmatpush1.msra.mxu0 0.0
        %449 = vmatprep.subr.mxu0 0.0
        %450 = vmatpush1.msra.mxu0 0.0
        %451 = vmatprep.subr.mxu0 0.0
        %452 = vmatpush1.msra.mxu0 0.0
        %453 = vmatprep.subr.mxu0 0.0
        %454 = vmatpush1.msra.mxu0 0.0
        %455 = vmatprep.subr.mxu0 0.0
        %456 = vmatpush1.msra.mxu0 0.0
        %457 = vmatprep.subr.mxu0 0.0
        %458 = vmatpush1.msra.mxu0 0.0
        %459 = vmatprep.subr.mxu0 0.0
        %460 = vmatpush1.msra.mxu0 0.0
        %461 = vmatprep.subr.mxu0 0.0
        %462 = vmatpush1.msra.mxu0 0.0
        %463 = vmatprep.subr.mxu0 0.0
        %464 = vmatpush1.msra.mxu0 0.0
        %465 = vmatprep.subr.mxu0 0.0
        %466 = vmatpush1.msra.mxu0 0.0
        %467 = vmatprep.subr.mxu0 0.0
        %468 = vmatpush1.msra.mxu0 0.0
        %469 = vmatprep.subr.mxu0 0.0
        %470 = vmatpush1.msra.mxu0 0.0
        %471 = vmatprep.subr.mxu0 0.0
        %472 = vmatpush1.msra.mxu0 0.0
        %473 = vmatprep.subr.mxu0 0.0
        %474 = vmatpush1.msra.mxu0 0.0
        %475 = vmatprep.subr.mxu0 0.0
        %476 = vmatpush1.msra.mxu0 0.0
        %477 = vmatprep.subr.mxu0 0.0
        %478 = vmatpush1.msra.mxu0 0.0
        %479 = vmatprep.mubr.f32.mxu0 0.0
        %480 = vmatmul.mubr.f32.gmra.mrb[0].mxu0 %v404
        %v481 = vpop.f32.mrb[0].mxu0
        %v482 = vadd.f32 %v395, %v481
        %v483 = vpop.f32.mrb[0].mxu0
        %v484 = vadd.f32 %v399, %v483
        %485 = vmatprep.mubr.f32.mxu0 0.0
        %486 = vmatmul.mubr.f32.gmra.mrb[0].mxu0 %v407
        %v487 = vpop.f32.mrb[0].mxu0
        %v488 = vadd.f32 %v395, %v487
        %v489 = vpop.f32.mrb[0].mxu0
        %v490 = vadd.f32 %v399, %v489
        %491 = vmatprep.mubr.f32.mxu0 0.0
        %492 = vmatmul.mubr.f32.gmra.mrb[0].mxu0 %v410
        %v493 = vpop.f32.mrb[0].mxu0
        %v494 = vadd.f32 %v395, %v493
        %v495 = vpop.f32.mrb[0].mxu0
        %v496 = vadd.f32 %v399, %v495
        %497 = vmatprep.mubr.f32.mxu0 0.0
        %498 = vmatmul.mubr.f32.gmra.mrb[0].mxu0 %v413
        %v499 = vpop.f32.mrb[0].mxu0
        %v500 = vadd.f32 %v395, %v499
        %v501 = vpop.f32.mrb[0].mxu0
        %v502 = vadd.f32 %v399, %v501
        %503 = vdwg.mxu0
        %v504 = vmax.f32 %v482, 0.0
        %v505 = vmax.f32 %v484, 0.0
        %v506 = vmax.f32 %v488, 0.0
        %v507 = vmax.f32 %v490, 0.0
        %v508 = vmax.f32 %v494, 0.0
        %v509 = vmax.f32 %v496, 0.0
        %v510 = vmax.f32 %v500, 0.0
        %v511 = vmax.f32 %v502, 0.0
        %v512 = vld [vmem:[#allocation2] sm:$0xff]
        %v513 = vld [vmem:[#allocation2 + $0x8] sm:$0xff]
        %v514 = vld [vmem:[#allocation2 + $0x10] sm:$0xff]
        %v515 = vld [vmem:[#allocation2 + $0x18] sm:$0xff]
        %v516 = vld [vmem:[#allocation2 + $0x20] sm:$0xff]
        %v517 = vld [vmem:[#allocation2 + $0x28] sm:$0xff]
        %v518 = vld [vmem:[#allocation2 + $0x30] sm:$0xff]
        %v519 = vld [vmem:[#allocation2 + $0x38] sm:$0xff]
        %v520 = vld [vmem:[#allocation2 + $0x40] sm:$0xff]
        %v521 = vld [vmem:[#allocation2 + $0x48] sm:$0xff]
        %v522 = vld [vmem:[#allocation2 + $0x50] sm:$0xff]
        %v523 = vld [vmem:[#allocation2 + $0x58] sm:$0xff]
        %v524 = vld [vmem:[#allocation2 + $0x60] sm:$0xff]
        %v525 = vld [vmem:[#allocation2 + $0x68] sm:$0xff]
        %v526 = vld [vmem:[#allocation2 + $0x70] sm:$0xff]
        %v527 = vld [vmem:[#allocation2 + $0x78] sm:$0xff]
        %v528 = vld [vmem:[#allocation2 + $0x80] sm:$0xff]
        %v529 = vld [vmem:[#allocation2 + $0x88] sm:$0xff]
        %v530 = vld [vmem:[#allocation2 + $0x90] sm:$0xff]
        %v531 = vld [vmem:[#allocation2 + $0x98] sm:$0xff]
        %v532 = vld [vmem:[#allocation2 + $0xa0] sm:$0xff]
        %v533 = vld [vmem:[#allocation2 + $0xa8] sm:$0xff]
        %v534 = vld [vmem:[#allocation2 + $0xb0] sm:$0xff]
        %v535 = vld [vmem:[#allocation2 + $0xb8] sm:$0xff]
        %v536 = vld [vmem:[#allocation2 + $0xc0] sm:$0xff]
        %v537 = vld [vmem:[#allocation2 + $0xc8] sm:$0xff]
        %v538 = vld [vmem:[#allocation2 + $0xd0] sm:$0xff]
        %v539 = vld [vmem:[#allocation2 + $0xd8] sm:$0xff]
        %v540 = vld [vmem:[#allocation2 + $0xe0] sm:$0xff]
        %v541 = vld [vmem:[#allocation2 + $0xe8] sm:$0xff]
        %v542 = vld [vmem:[#allocation2 + $0xf0] sm:$0xff]
        %v543 = vld [vmem:[#allocation2 + $0xf8] sm:$0xff]
        %v544 = vld [vmem:[#allocation2 + $0x100] sm:$0xff]
        %v545 = vld [vmem:[#allocation2 + $0x108] sm:$0xff]
        %v546 = vld [vmem:[#allocation2 + $0x110] sm:$0xff]
        %v547 = vld [vmem:[#allocation2 + $0x118] sm:$0xff]
        %v548 = vld [vmem:[#allocation2 + $0x120] sm:$0xff]
        %v549 = vld [vmem:[#allocation2 + $0x128] sm:$0xff]
        %v550 = vld [vmem:[#allocation2 + $0x130] sm:$0xff]
        %v551 = vld [vmem:[#allocation2 + $0x138] sm:$0xff]
        %v552 = vld [vmem:[#allocation2 + $0x140] sm:$0xff]
        %v553 = vld [vmem:[#allocation2 + $0x148] sm:$0xff]
        %v554 = vld [vmem:[#allocation2 + $0x150] sm:$0xff]
        %v555 = vld [vmem:[#allocation2 + $0x158] sm:$0xff]
        %v556 = vld [vmem:[#allocation2 + $0x160] sm:$0xff]
        %v557 = vld [vmem:[#allocation2 + $0x168] sm:$0xff]
        %v558 = vld [vmem:[#allocation2 + $0x170] sm:$0xff]
        %v559 = vld [vmem:[#allocation2 + $0x178] sm:$0xff]
        %v560 = vld [vmem:[#allocation2 + $0x180] sm:$0xff]
        %v561 = vld [vmem:[#allocation2 + $0x188] sm:$0xff]
        %v562 = vld [vmem:[#allocation2 + $0x190] sm:$0xff]
        %v563 = vld [vmem:[#allocation2 + $0x198] sm:$0xff]
        %v564 = vld [vmem:[#allocation2 + $0x1a0] sm:$0xff]
        %v565 = vld [vmem:[#allocation2 + $0x1a8] sm:$0xff]
        %v566 = vld [vmem:[#allocation2 + $0x1b0] sm:$0xff]
        %v567 = vld [vmem:[#allocation2 + $0x1b8] sm:$0xff]
        %v568 = vld [vmem:[#allocation2 + $0x1c0] sm:$0xff]
        %v569 = vld [vmem:[#allocation2 + $0x1c8] sm:$0xff]
        %v570 = vld [vmem:[#allocation2 + $0x1d0] sm:$0xff]
        %v571 = vld [vmem:[#allocation2 + $0x1d8] sm:$0xff]
        %v572 = vld [vmem:[#allocation2 + $0x1e0] sm:$0xff]
        %v573 = vld [vmem:[#allocation2 + $0x1e8] sm:$0xff]
        %v574 = vld [vmem:[#allocation2 + $0x1f0] sm:$0xff]
        %v575 = vld [vmem:[#allocation2 + $0x1f8] sm:$0xff]
        %v576 = vld [vmem:[%s4] sm:$0x3]
        %v578 = vlaneseq
        %v579 = vshrl.u32 %v578, 7
        %v580 = vsub.s32 0, %v579
        %v581 = vrot.slane %v576, %v580
        %v582 = vlaneseq
        %v583 = vshrl.u32 %v582, 7
        %v584 = vsub.s32 1, %v583
        %v585 = vrot.slane %v576, %v584
        %588 = vmatprep.subr.mxu0 %v513
        %589 = vmatpush1.msra.mxu0 %v512
        %590 = vmatprep.subr.mxu0 %v515
        %591 = vmatpush1.msra.mxu0 %v514
        %592 = vmatprep.subr.mxu0 %v517
        %593 = vmatpush1.msra.mxu0 %v516
        %594 = vmatprep.subr.mxu0 %v519
        %595 = vmatpush1.msra.mxu0 %v518
        %596 = vmatprep.subr.mxu0 %v521
        %597 = vmatpush1.msra.mxu0 %v520
        %598 = vmatprep.subr.mxu0 %v523
        %599 = vmatpush1.msra.mxu0 %v522
        %600 = vmatprep.subr.mxu0 %v525
        %601 = vmatpush1.msra.mxu0 %v524
        %602 = vmatprep.subr.mxu0 %v527
        %603 = vmatpush1.msra.mxu0 %v526
        %604 = vmatprep.subr.mxu0 %v529
        %605 = vmatpush1.msra.mxu0 %v528
        %606 = vmatprep.subr.mxu0 %v531
        %607 = vmatpush1.msra.mxu0 %v530
        %608 = vmatprep.subr.mxu0 %v533
        %609 = vmatpush1.msra.mxu0 %v532
        %610 = vmatprep.subr.mxu0 %v535
        %611 = vmatpush1.msra.mxu0 %v534
        %612 = vmatprep.subr.mxu0 %v537
        %613 = vmatpush1.msra.mxu0 %v536
        %614 = vmatprep.subr.mxu0 %v539
        %615 = vmatpush1.msra.mxu0 %v538
        %616 = vmatprep.subr.mxu0 %v541
        %617 = vmatpush1.msra.mxu0 %v540
        %618 = vmatprep.subr.mxu0 %v543
        %619 = vmatpush1.msra.mxu0 %v542
        %620 = vmatprep.subr.mxu0 %v545
        %621 = vmatpush1.msra.mxu0 %v544
        %622 = vmatprep.subr.mxu0 %v547
        %623 = vmatpush1.msra.mxu0 %v546
        %624 = vmatprep.subr.mxu0 %v549
        %625 = vmatpush1.msra.mxu0 %v548
        %626 = vmatprep.subr.mxu0 %v551
        %627 = vmatpush1.msra.mxu0 %v550
        %628 = vmatprep.subr.mxu0 %v553
        %629 = vmatpush1.msra.mxu0 %v552
        %630 = vmatprep.subr.mxu0 %v555
        %631 = vmatpush1.msra.mxu0 %v554
        %632 = vmatprep.subr.mxu0 %v557
        %633 = vmatpush1.msra.mxu0 %v556
        %634 = vmatprep.subr.mxu0 %v559
        %635 = vmatpush1.msra.mxu0 %v558
        %636 = vmatprep.subr.mxu0 %v561
        %637 = vmatpush1.msra.mxu0 %v560
        %638 = vmatprep.subr.mxu0 %v563
        %639 = vmatpush1.msra.mxu0 %v562
        %640 = vmatprep.subr.mxu0 %v565
        %641 = vmatpush1.msra.mxu0 %v564
        %642 = vmatprep.subr.mxu0 %v567
        %643 = vmatpush1.msra.mxu0 %v566
        %644 = vmatprep.subr.mxu0 %v569
        %645 = vmatpush1.msra.mxu0 %v568
        %646 = vmatprep.subr.mxu0 %v571
        %647 = vmatpush1.msra.mxu0 %v570
        %648 = vmatprep.subr.mxu0 %v573
        %649 = vmatpush1.msra.mxu0 %v572
        %650 = vmatprep.subr.mxu0 %v575
        %651 = vmatpush1.msra.mxu0 %v574
        %652 = vmatprep.mubr.f32.mxu0 %v505
        %653 = vmatmul.mubr.f32.gmra.mrb[0].mxu0 %v504
        %v654 = vpop.f32.mrb[0].mxu0
        %v655 = vadd.f32 %v581, %v654
        %v656 = vpop.f32.mrb[0].mxu0
        %v657 = vadd.f32 %v585, %v656
        %658 = vmatprep.mubr.f32.mxu0 %v507
        %659 = vmatmul.mubr.f32.gmra.mrb[0].mxu0 %v506
        %v660 = vpop.f32.mrb[0].mxu0
        %v661 = vadd.f32 %v581, %v660
        %v662 = vpop.f32.mrb[0].mxu0
        %v663 = vadd.f32 %v585, %v662
        %664 = vmatprep.mubr.f32.mxu0 %v509
        %665 = vmatmul.mubr.f32.gmra.mrb[0].mxu0 %v508
        %v666 = vpop.f32.mrb[0].mxu0
        %v667 = vadd.f32 %v581, %v666
        %v668 = vpop.f32.mrb[0].mxu0
        %v669 = vadd.f32 %v585, %v668
        %670 = vmatprep.mubr.f32.mxu0 %v511
        %671 = vmatmul.mubr.f32.gmra.mrb[0].mxu0 %v510
        %v672 = vpop.f32.mrb[0].mxu0
        %v673 = vadd.f32 %v581, %v672
        %v674 = vpop.f32.mrb[0].mxu0
        %v675 = vadd.f32 %v585, %v674
        %676 = vdwg.mxu0
        %v677 = vmax.f32 %v655, 0.0
        %v678 = vmax.f32 %v657, 0.0
        %v679 = vmax.f32 %v661, 0.0
        %v680 = vmax.f32 %v663, 0.0
        %v681 = vmax.f32 %v667, 0.0
        %v682 = vmax.f32 %v669, 0.0
        %v683 = vmax.f32 %v673, 0.0
        %v684 = vmax.f32 %v675, 0.0
        %v685 = vld [vmem:[#allocation5] sm:$0xff]
        %v686 = vld [vmem:[#allocation5 + $0x8] sm:$0xff]
        %v687 = vld [vmem:[#allocation5 + $0x10] sm:$0xff]
        %v688 = vld [vmem:[#allocation5 + $0x18] sm:$0xff]
        %v689 = vld [vmem:[#allocation5 + $0x20] sm:$0xff]
        %v690 = vld [vmem:[#allocation5 + $0x28] sm:$0xff]
        %v691 = vld [vmem:[#allocation5 + $0x30] sm:$0xff]
        %v692 = vld [vmem:[#allocation5 + $0x38] sm:$0xff]
        %v693 = vld [vmem:[#allocation5 + $0x40] sm:$0xff]
        %v694 = vld [vmem:[#allocation5 + $0x48] sm:$0xff]
        %v695 = vld [vmem:[#allocation5 + $0x50] sm:$0xff]
        %v696 = vld [vmem:[#allocation5 + $0x58] sm:$0xff]
        %v697 = vld [vmem:[#allocation5 + $0x60] sm:$0xff]
        %v698 = vld [vmem:[#allocation5 + $0x68] sm:$0xff]
        %v699 = vld [vmem:[#allocation5 + $0x70] sm:$0xff]
        %v700 = vld [vmem:[#allocation5 + $0x78] sm:$0xff]
        %v701 = vld [vmem:[#allocation5 + $0x80] sm:$0xff]
        %v702 = vld [vmem:[#allocation5 + $0x88] sm:$0xff]
        %v703 = vld [vmem:[#allocation5 + $0x90] sm:$0xff]
        %v704 = vld [vmem:[#allocation5 + $0x98] sm:$0xff]
        %v705 = vld [vmem:[#allocation5 + $0xa0] sm:$0xff]
        %v706 = vld [vmem:[#allocation5 + $0xa8] sm:$0xff]
        %v707 = vld [vmem:[#allocation5 + $0xb0] sm:$0xff]
        %v708 = vld [vmem:[#allocation5 + $0xb8] sm:$0xff]
        %v709 = vld [vmem:[#allocation5 + $0xc0] sm:$0xff]
        %v710 = vld [vmem:[#allocation5 + $0xc8] sm:$0xff]
        %v711 = vld [vmem:[#allocation5 + $0xd0] sm:$0xff]
        %v712 = vld [vmem:[#allocation5 + $0xd8] sm:$0xff]
        %v713 = vld [vmem:[#allocation5 + $0xe0] sm:$0xff]
        %v714 = vld [vmem:[#allocation5 + $0xe8] sm:$0xff]
        %v715 = vld [vmem:[#allocation5 + $0xf0] sm:$0xff]
        %v716 = vld [vmem:[#allocation5 + $0xf8] sm:$0xff]
        %v717 = vld [vmem:[#allocation5 + $0x100] sm:$0xff]
        %v718 = vld [vmem:[#allocation5 + $0x108] sm:$0xff]
        %v719 = vld [vmem:[#allocation5 + $0x110] sm:$0xff]
        %v720 = vld [vmem:[#allocation5 + $0x118] sm:$0xff]
        %v721 = vld [vmem:[#allocation5 + $0x120] sm:$0xff]
        %v722 = vld [vmem:[#allocation5 + $0x128] sm:$0xff]
        %v723 = vld [vmem:[#allocation5 + $0x130] sm:$0xff]
        %v724 = vld [vmem:[#allocation5 + $0x138] sm:$0xff]
        %v725 = vld [vmem:[#allocation5 + $0x140] sm:$0xff]
        %v726 = vld [vmem:[#allocation5 + $0x148] sm:$0xff]
        %v727 = vld [vmem:[#allocation5 + $0x150] sm:$0xff]
        %v728 = vld [vmem:[#allocation5 + $0x158] sm:$0xff]
        %v729 = vld [vmem:[#allocation5 + $0x160] sm:$0xff]
        %v730 = vld [vmem:[#allocation5 + $0x168] sm:$0xff]
        %v731 = vld [vmem:[#allocation5 + $0x170] sm:$0xff]
        %v732 = vld [vmem:[#allocation5 + $0x178] sm:$0xff]
        %v733 = vld [vmem:[#allocation5 + $0x180] sm:$0xff]
        %v734 = vld [vmem:[#allocation5 + $0x188] sm:$0xff]
        %v735 = vld [vmem:[#allocation5 + $0x190] sm:$0xff]
        %v736 = vld [vmem:[#allocation5 + $0x198] sm:$0xff]
        %v737 = vld [vmem:[#allocation5 + $0x1a0] sm:$0xff]
        %v738 = vld [vmem:[#allocation5 + $0x1a8] sm:$0xff]
        %v739 = vld [vmem:[#allocation5 + $0x1b0] sm:$0xff]
        %v740 = vld [vmem:[#allocation5 + $0x1b8] sm:$0xff]
        %v741 = vld [vmem:[#allocation5 + $0x1c0] sm:$0xff]
        %v742 = vld [vmem:[#allocation5 + $0x1c8] sm:$0xff]
        %v743 = vld [vmem:[#allocation5 + $0x1d0] sm:$0xff]
        %v744 = vld [vmem:[#allocation5 + $0x1d8] sm:$0xff]
        %v745 = vld [vmem:[#allocation5 + $0x1e0] sm:$0xff]
        %v746 = vld [vmem:[#allocation5 + $0x1e8] sm:$0xff]
        %v747 = vld [vmem:[#allocation5 + $0x1f0] sm:$0xff]
        %v748 = vld [vmem:[#allocation5 + $0x1f8] sm:$0xff]
        %v749 = vld [vmem:[%s6] sm:$0x3]
        %v751 = vlaneseq
        %v752 = vshrl.u32 %v751, 7
        %v753 = vsub.s32 0, %v752
        %v754 = vrot.slane %v749, %v753
        %v755 = vlaneseq
        %v756 = vshrl.u32 %v755, 7
        %v757 = vsub.s32 1, %v756
        %v758 = vrot.slane %v749, %v757
        %761 = vmatprep.subr.mxu0 %v686
        %762 = vmatpush1.msra.mxu0 %v685
        %763 = vmatprep.subr.mxu0 %v688
        %764 = vmatpush1.msra.mxu0 %v687
        %765 = vmatprep.subr.mxu0 %v690
        %766 = vmatpush1.msra.mxu0 %v689
        %767 = vmatprep.subr.mxu0 %v692
        %768 = vmatpush1.msra.mxu0 %v691
        %769 = vmatprep.subr.mxu0 %v694
        %770 = vmatpush1.msra.mxu0 %v693
        %771 = vmatprep.subr.mxu0 %v696
        %772 = vmatpush1.msra.mxu0 %v695
        %773 = vmatprep.subr.mxu0 %v698
        %774 = vmatpush1.msra.mxu0 %v697
        %775 = vmatprep.subr.mxu0 %v700
        %776 = vmatpush1.msra.mxu0 %v699
        %777 = vmatprep.subr.mxu0 %v702
        %778 = vmatpush1.msra.mxu0 %v701
        %779 = vmatprep.subr.mxu0 %v704
        %780 = vmatpush1.msra.mxu0 %v703
        %781 = vmatprep.subr.mxu0 %v706
        %782 = vmatpush1.msra.mxu0 %v705
        %783 = vmatprep.subr.mxu0 %v708
        %784 = vmatpush1.msra.mxu0 %v707
        %785 = vmatprep.subr.mxu0 %v710
        %786 = vmatpush1.msra.mxu0 %v709
        %787 = vmatprep.subr.mxu0 %v712
        %788 = vmatpush1.msra.mxu0 %v711
        %789 = vmatprep.subr.mxu0 %v714
        %790 = vmatpush1.msra.mxu0 %v713
        %791 = vmatprep.subr.mxu0 %v716
        %792 = vmatpush1.msra.mxu0 %v715
        %793 = vmatprep.subr.mxu0 %v718
        %794 = vmatpush1.msra.mxu0 %v717
        %795 = vmatprep.subr.mxu0 %v720
        %796 = vmatpush1.msra.mxu0 %v719
        %797 = vmatprep.subr.mxu0 %v722
        %798 = vmatpush1.msra.mxu0 %v721
        %799 = vmatprep.subr.mxu0 %v724
        %800 = vmatpush1.msra.mxu0 %v723
        %801 = vmatprep.subr.mxu0 %v726
        %802 = vmatpush1.msra.mxu0 %v725
        %803 = vmatprep.subr.mxu0 %v728
        %804 = vmatpush1.msra.mxu0 %v727
        %805 = vmatprep.subr.mxu0 %v730
        %806 = vmatpush1.msra.mxu0 %v729
        %807 = vmatprep.subr.mxu0 %v732
        %808 = vmatpush1.msra.mxu0 %v731
        %809 = vmatprep.subr.mxu0 %v734
        %810 = vmatpush1.msra.mxu0 %v733
        %811 = vmatprep.subr.mxu0 %v736
        %812 = vmatpush1.msra.mxu0 %v735
        %813 = vmatprep.subr.mxu0 %v738
        %814 = vmatpush1.msra.mxu0 %v737
        %815 = vmatprep.subr.mxu0 %v740
        %816 = vmatpush1.msra.mxu0 %v739
        %817 = vmatprep.subr.mxu0 %v742
        %818 = vmatpush1.msra.mxu0 %v741
        %819 = vmatprep.subr.mxu0 %v744
        %820 = vmatpush1.msra.mxu0 %v743
        %821 = vmatprep.subr.mxu0 %v746
        %822 = vmatpush1.msra.mxu0 %v745
        %823 = vmatprep.subr.mxu0 %v748
        %824 = vmatpush1.msra.mxu0 %v747
        %825 = vmatprep.mubr.f32.mxu0 %v678
        %826 = vmatmul.mubr.f32.gmra.mrb[0].mxu0 %v677
        %v827 = vpop.f32.mrb[0].mxu0
        %v828 = vadd.f32 %v754, %v827
        %v829 = vpop.f32.mrb[0].mxu0
        %v830 = vadd.f32 %v758, %v829
        %831 = vmatprep.mubr.f32.mxu0 %v680
        %832 = vmatmul.mubr.f32.gmra.mrb[0].mxu0 %v679
        %v833 = vpop.f32.mrb[0].mxu0
        %v834 = vadd.f32 %v754, %v833
        %v835 = vpop.f32.mrb[0].mxu0
        %v836 = vadd.f32 %v758, %v835
        %837 = vmatprep.mubr.f32.mxu0 %v682
        %838 = vmatmul.mubr.f32.gmra.mrb[0].mxu0 %v681
        %v839 = vpop.f32.mrb[0].mxu0
        %v840 = vadd.f32 %v754, %v839
        %v841 = vpop.f32.mrb[0].mxu0
        %v842 = vadd.f32 %v758, %v841
        %843 = vmatprep.mubr.f32.mxu0 %v684
        %844 = vmatmul.mubr.f32.gmra.mrb[0].mxu0 %v683
        %v845 = vpop.f32.mrb[0].mxu0
        %v846 = vadd.f32 %v754, %v845
        %v847 = vpop.f32.mrb[0].mxu0
        %v848 = vadd.f32 %v758, %v847
        %849 = vdwg.mxu0
        %v850 = vmax.f32 %v828, 0.0
        %v851 = vmax.f32 %v830, 0.0
        %v852 = vmax.f32 %v834, 0.0
        %v853 = vmax.f32 %v836, 0.0
        %v854 = vmax.f32 %v840, 0.0
        %v855 = vmax.f32 %v842, 0.0
        %v856 = vmax.f32 %v846, 0.0
        %v857 = vmax.f32 %v848, 0.0
        %v858 = vld [vmem:[#allocation7] sm:$0xff]
        %v859 = vld [vmem:[#allocation7 + $0x8] sm:$0xff]
        %v860 = vld [vmem:[#allocation7 + $0x10] sm:$0xff]
        %v861 = vld [vmem:[#allocation7 + $0x18] sm:$0xff]
        %v862 = vld [vmem:[#allocation7 + $0x20] sm:$0xff]
        %v863 = vld [vmem:[#allocation7 + $0x28] sm:$0xff]
        %v864 = vld [vmem:[#allocation7 + $0x30] sm:$0xff]
        %v865 = vld [vmem:[#allocation7 + $0x38] sm:$0xff]
        %v866 = vld [vmem:[#allocation7 + $0x40] sm:$0xff]
        %v867 = vld [vmem:[#allocation7 + $0x48] sm:$0xff]
        %v868 = vld [vmem:[#allocation7 + $0x50] sm:$0xff]
        %v869 = vld [vmem:[#allocation7 + $0x58] sm:$0xff]
        %v870 = vld [vmem:[#allocation7 + $0x60] sm:$0xff]
        %v871 = vld [vmem:[#allocation7 + $0x68] sm:$0xff]
        %v872 = vld [vmem:[#allocation7 + $0x70] sm:$0xff]
        %v873 = vld [vmem:[#allocation7 + $0x78] sm:$0xff]
        %v874 = vld [vmem:[#allocation7 + $0x80] sm:$0xff]
        %v875 = vld [vmem:[#allocation7 + $0x88] sm:$0xff]
        %v876 = vld [vmem:[#allocation7 + $0x90] sm:$0xff]
        %v877 = vld [vmem:[#allocation7 + $0x98] sm:$0xff]
        %v878 = vld [vmem:[#allocation7 + $0xa0] sm:$0xff]
        %v879 = vld [vmem:[#allocation7 + $0xa8] sm:$0xff]
        %v880 = vld [vmem:[#allocation7 + $0xb0] sm:$0xff]
        %v881 = vld [vmem:[#allocation7 + $0xb8] sm:$0xff]
        %v882 = vld [vmem:[#allocation7 + $0xc0] sm:$0xff]
        %v883 = vld [vmem:[#allocation7 + $0xc8] sm:$0xff]
        %v884 = vld [vmem:[#allocation7 + $0xd0] sm:$0xff]
        %v885 = vld [vmem:[#allocation7 + $0xd8] sm:$0xff]
        %v886 = vld [vmem:[#allocation7 + $0xe0] sm:$0xff]
        %v887 = vld [vmem:[#allocation7 + $0xe8] sm:$0xff]
        %v888 = vld [vmem:[#allocation7 + $0xf0] sm:$0xff]
        %v889 = vld [vmem:[#allocation7 + $0xf8] sm:$0xff]
        %v890 = vld [vmem:[%s8] sm:$0x1]
        %v892 = vlaneseq
        %v893 = vshrl.u32 %v892, 7
        %v894 = vsub.s32 0, %v893
        %v895 = vrot.slane %v890, %v894
        %897 = vmatprep.subr.mxu0 0.0
        %898 = vmatpush1.msra.mxu0 %v858
        %899 = vmatprep.subr.mxu0 0.0
        %900 = vmatpush1.msra.mxu0 %v859
        %901 = vmatprep.subr.mxu0 0.0
        %902 = vmatpush1.msra.mxu0 %v860
        %903 = vmatprep.subr.mxu0 0.0
        %904 = vmatpush1.msra.mxu0 %v861
        %905 = vmatprep.subr.mxu0 0.0
        %906 = vmatpush1.msra.mxu0 %v862
        %907 = vmatprep.subr.mxu0 0.0
        %908 = vmatpush1.msra.mxu0 %v863
        %909 = vmatprep.subr.mxu0 0.0
        %910 = vmatpush1.msra.mxu0 %v864
        %911 = vmatprep.subr.mxu0 0.0
        %912 = vmatpush1.msra.mxu0 %v865
        %913 = vmatprep.subr.mxu0 0.0
        %914 = vmatpush1.msra.mxu0 %v866
        %915 = vmatprep.subr.mxu0 0.0
        %916 = vmatpush1.msra.mxu0 %v867
        %917 = vmatprep.subr.mxu0 0.0
        %918 = vmatpush1.msra.mxu0 %v868
        %919 = vmatprep.subr.mxu0 0.0
        %920 = vmatpush1.msra.mxu0 %v869
        %921 = vmatprep.subr.mxu0 0.0
        %922 = vmatpush1.msra.mxu0 %v870
        %923 = vmatprep.subr.mxu0 0.0
        %924 = vmatpush1.msra.mxu0 %v871
        %925 = vmatprep.subr.mxu0 0.0
        %926 = vmatpush1.msra.mxu0 %v872
        %927 = vmatprep.subr.mxu0 0.0
        %928 = vmatpush1.msra.mxu0 %v873
        %929 = vmatprep.subr.mxu0 0.0
        %930 = vmatpush1.msra.mxu0 %v874
        %931 = vmatprep.subr.mxu0 0.0
        %932 = vmatpush1.msra.mxu0 %v875
        %933 = vmatprep.subr.mxu0 0.0
        %934 = vmatpush1.msra.mxu0 %v876
        %935 = vmatprep.subr.mxu0 0.0
        %936 = vmatpush1.msra.mxu0 %v877
        %937 = vmatprep.subr.mxu0 0.0
        %938 = vmatpush1.msra.mxu0 %v878
        %939 = vmatprep.subr.mxu0 0.0
        %940 = vmatpush1.msra.mxu0 %v879
        %941 = vmatprep.subr.mxu0 0.0
        %942 = vmatpush1.msra.mxu0 %v880
        %943 = vmatprep.subr.mxu0 0.0
        %944 = vmatpush1.msra.mxu0 %v881
        %945 = vmatprep.subr.mxu0 0.0
        %946 = vmatpush1.msra.mxu0 %v882
        %947 = vmatprep.subr.mxu0 0.0
        %948 = vmatpush1.msra.mxu0 %v883
        %949 = vmatprep.subr.mxu0 0.0
        %950 = vmatpush1.msra.mxu0 %v884
        %951 = vmatprep.subr.mxu0 0.0
        %952 = vmatpush1.msra.mxu0 %v885
        %953 = vmatprep.subr.mxu0 0.0
        %954 = vmatpush1.msra.mxu0 %v886
        %955 = vmatprep.subr.mxu0 0.0
        %956 = vmatpush1.msra.mxu0 %v887
        %957 = vmatprep.subr.mxu0 0.0
        %958 = vmatpush1.msra.mxu0 %v888
        %959 = vmatprep.subr.mxu0 0.0
        %960 = vmatpush1.msra.mxu0 %v889
        %961 = vmatprep.mubr.f32.mxu0 %v851
        %962 = vmatmul.mubr.f32.gmra.mrb[0].mxu0 %v850
        %v963 = vpop.f32.mrb[0].mxu0
        %v964 = vadd.f32 %v895, %v963
        %v965 = vpop.f32.mrb[0].mxu0
        %966 = vmatprep.mubr.f32.mxu0 %v853
        %967 = vmatmul.mubr.f32.gmra.mrb[0].mxu0 %v852
        %v968 = vpop.f32.mrb[0].mxu0
        %v969 = vadd.f32 %v895, %v968
        %v970 = vpop.f32.mrb[0].mxu0
        %971 = vmatprep.mubr.f32.mxu0 %v855
        %972 = vmatmul.mubr.f32.gmra.mrb[0].mxu0 %v854
        %v973 = vpop.f32.mrb[0].mxu0
        %v974 = vadd.f32 %v895, %v973
        %v975 = vpop.f32.mrb[0].mxu0
        %976 = vmatprep.mubr.f32.mxu0 %v857
        %977 = vmatmul.mubr.f32.gmra.mrb[0].mxu0 %v856
        %v978 = vpop.f32.mrb[0].mxu0
        %v979 = vadd.f32 %v895, %v978
        %v980 = vpop.f32.mrb[0].mxu0
        %981 = vdwg.mxu0
        %982 = vst [vmem:[%s370] sm:$0xff] %v964
        %983 = vst [vmem:[%s370 + $0x8] sm:$0xff] %v969
        %984 = vst [vmem:[%s370 + $0x10] sm:$0xff] %v974
        %985 = vst [vmem:[%s370 + $0x18] sm:$0xff] %v979
        %s986 = sand.u32 %s227, 1
        %s987 = scalar_lea.sflag [#allocation4], %s986
        %s988 = sand.u32 %s227, 1
        %s989 = smul.addr %s988, 32
        %s990 = scalar_lea.vmem [#allocation8], %s989
        // Predicated region
        $region69: #{tpu_custom_call.1} parent=55 // pred_check
          %p991 = pneg %p237
        $region70: #{tpu_custom_call.1} parent=55 // pred_check_branch
          %993 = sbr.rel (%p991) target = $region72
        $region71: #{tpu_custom_call.1} parent=55 // pred_region
          %s994 = smul.u32 4, %s25
          %s996 = ssub.s32 512, 512
          %997 = vsyncadd %s987, %s996
          %s998 = smul.addr %s994, 128
          %s999 = scalar_lea.hbm %s9, %s998
          %s1000 = sshll.u32 %s990, 4
          %s1001 = int_to_ptr.vmem [resolvable:$true] %s1000
          %1006 = dma.vmem_to_hbm [thread:$0]  %s1001, 512, %s999, %s987, 128, 128, 8
        $region72: #{tpu_custom_call.1} parent=55 // pred_fallthru
          _
      $region56: #{tpu_custom_call.1} parent=5 // pred_fallthru
        _
      %p1007 = scmp.le.s32.totalorder 2, %s20
      // Predicated region
      $region73: #{tpu_custom_call.1} parent=5 // pred_check
        %p1008 = pneg %p1007
      $region74: #{tpu_custom_call.1} parent=5 // pred_check_branch
        %1010 = sbr.rel (%p1008) target = $region76
      $region75: #{tpu_custom_call.1} parent=5 // pred_region
        %s1011 = ssub.s32 %s20, 2
        // Predicated region
        $region77: #{tpu_custom_call.1} parent=75 // pred_check
          %p1012 = pneg %p243
        $region78: #{tpu_custom_call.1} parent=75 // pred_check_branch
          %1014 = sbr.rel (%p1012) target = $region80
        $region79: #{tpu_custom_call.1} parent=75 // pred_region
          %s1015 = sand.u32 %s228, 1
          %s1016 = scalar_lea.sflag [#allocation4], %s1015
          %s1017 = sand.u32 %s228, 1
          %s1018 = smul.addr %s1017, 32
          %s1019 = scalar_lea.vmem [#allocation8], %s1018
          %1020 = dma.done %s1016, 512
        $region80: #{tpu_custom_call.1} parent=75 // pred_fallthru
          _
      $region76: #{tpu_custom_call.1} parent=5 // pred_fallthru
        _
    $region6: #{tpu_custom_call.1} parent=1 // loop_footer
      %s24 = sadd.s32 1, %s20
    $region7: #{tpu_custom_call.1} parent=1 // loop_footer_branch
      %19 = sbr.rel target = $region3
    $region8: #{tpu_custom_call.1} parent=1 // loop_exit
      _
    %1021 = vsyncpa [#allocation3], 1
    %s1022 = scalar_lea.sflag [#allocation3], 1
    %1023 = vsyncpa %s1022, 1
    %1024 = vsyncpa [#allocation6], 1
    %1025 = vsyncpa [#allocation4], 1
    %s1026 = scalar_lea.sflag [#allocation4], 1
    %1027 = vsyncpa %s1026, 1

</llo_original>
